<compile_context>
chip_gen: v7x
topology: tpu7x:2x2x1
jax: 0.10.0
libtpu: 0.0.40
codegen_flags: <defaults>
</compile_context>

<pallas_src>
import functools

import jax
import jax.numpy as jnp
from jax.experimental import pallas as pl
from jax.experimental.pallas import tpu as pltpu


def _identity_kernel(x_ref, o_ref):
    # IdenticalPool.forward: out = x, verbatim.
    o_ref[...] = x_ref[...]


@functools.partial(jax.jit, static_argnames=("block_rows",))
def identical_pool_forward(x, batch=None, *, block_rows=256):
    """IdenticalPool.forward(x, batch) -> x.

    `batch` is accepted to mirror the PyTorch signature but is unused by the
    module (it performs no per-graph reduction), so it never enters the kernel.
    """
    del batch  # unused by IdenticalPool
    n, f = x.shape

    # Row tile: either the full array (any n) or a multiple-of-8 block of rows,
    # so the BlockSpec satisfies the (8, 128) tiling constraint.  The feature
    # dim stays whole => lane-dense loads/stores (no masked partial vst).
    if n <= block_rows:
        tm = n
    else:
        tm = block_rows  # block_rows is a multiple of 8

    grid = (pl.cdiv(n, tm),)
    bytes_accessed = 2 * x.size * x.dtype.itemsize  # read x + write out

    return pl.pallas_call(
        _identity_kernel,
        out_shape=jax.ShapeDtypeStruct((n, f), x.dtype),
        grid_spec=pl.GridSpec(
            grid=grid,
            in_specs=[pl.BlockSpec((tm, f), lambda i: (i, 0))],
            out_specs=pl.BlockSpec((tm, f), lambda i: (i, 0)),
        ),
        compiler_params=pltpu.CompilerParams(
            dimension_semantics=("parallel",),
        ),
        cost_estimate=pl.CostEstimate(
            flops=0, transcendentals=0, bytes_accessed=bytes_accessed),
    )(x)


if __name__ == "__main__":
    key = jax.random.PRNGKey(0)
    kx, kb = jax.random.split(key)

    # Small GNN-ish shapes: 64 nodes, hidden dim 32, 4 graphs in the batch vec.
    num_nodes, dim_hidden, num_graphs = 64, 32, 4
    x = jax.random.normal(kx, (num_nodes, dim_hidden), jnp.float32)
    batch = jax.random.randint(kb, (num_nodes,), 0, num_graphs, dtype=jnp.int32)

    # Exercise the multi-step tiled grid path (4 row blocks of 16 rows) ...
    out = identical_pool_forward(x, batch, block_rows=16)
    out = jax.block_until_ready(out)
    assert out.shape == x.shape and out.dtype == x.dtype
    assert jnp.array_equal(out, x), "IdenticalPool must return x unchanged"

    # ... and the single-block (full-array) path with the default tile size.
    out2 = jax.block_until_ready(identical_pool_forward(x, batch))
    assert jnp.array_equal(out2, x)

    print("KERNEL_OK")
</pallas_src>

<mosaic_0001>
module attributes {stable_mosaic.version = 11 : i64} {
  func.func @_identity_kernel(%arg0: i32, %arg1: memref<16x32xf32, #tpu.memory_space<vmem>>, %arg2: memref<16x32xf32, #tpu.memory_space<vmem>>) attributes {dimension_semantics = [#tpu.dimension_semantics<parallel>], iteration_bounds = array<i64: 4>, scalar_prefetch = 0 : i64, scratch_operands = 0 : i64, tpu.core_type = #tpu.core_type<tc>, window_params = [{transform_indices = @transform_0, window_bounds = array<i64: 16, 32>}, {transform_indices = @transform_1, window_bounds = array<i64: 16, 32>}]} {
    %c0 = arith.constant 0 : index
    %c0_0 = arith.constant 0 : index
    %0 = vector.load %arg1[%c0, %c0_0] : memref<16x32xf32, #tpu.memory_space<vmem>>, vector<16x32xf32>
    %c0_1 = arith.constant 0 : index
    %c0_2 = arith.constant 0 : index
    %1 = vector.load %arg2[%c0_1, %c0_2] : memref<16x32xf32, #tpu.memory_space<vmem>>, vector<16x32xf32>
    tpu.vector_store %arg2[%c0_1, %c0_2], %0 {strides = array<i32>} : memref<16x32xf32, #tpu.memory_space<vmem>>, vector<16x32xf32>,
    return
  }
  func.func @transform_0(%arg0: i32) -> (i32, i32) {
    %c0_i32 = arith.constant 0 : i32
    %c0_i32_0 = arith.constant 0 : i32
    return %arg0, %c0_i32 : i32, i32
  }
  func.func @transform_1(%arg0: i32) -> (i32, i32) {
    %c0_i32 = arith.constant 0 : i32
    %c0_i32_0 = arith.constant 0 : i32
    return %arg0, %c0_i32 : i32, i32
  }
}

</mosaic_0001>

<llo_original>
// kernel: identical_pool_forward.1
$region0: #{identical_pool_forward.1}
  #allocation0 [shape = 'u32[]', space=smem, size = 0x4, offset = 0x4, fixed_abs, tag = 'smem constant byte address 0x4 - core index']
  #allocation1 [shape = 'u32[144,128]{1,0:T(1,128)}', space=vmem, size = 0x12000, scoped, tag = 'internal scratch']
  %s0 = inlined_call_operand.vmem [shape: f32[64,32], index: 0, kind: input, shape index: {}]
  %s1 = inlined_call_operand.vmem [shape: f32[64,32], index: 1, kind: output, shape index: {}]
  %s2 = sld [smem:[#allocation0]]
  $region37: #{identical_pool_forward.1} parent=0
    _
  %s4 = ssub.s32 1, %s2
  %s5 = scalar_select 0, %s4, %s2
  loop: start=0, step=1, limit=6
  $region2: #{identical_pool_forward.1} parent=0 // loop_pre_header
    _
  $region3: #{identical_pool_forward.1} parent=0 // loop_header
    %s7 = sphi 0, %s11
    %p8 = scmp.ge.s32.totalorder %s7, 6
    %s17 = sphi 0, %s19
    %s20 = sphi 0, %s17
    %s21 = sphi 0, %s20
    %s37 = sphi 0, %s21
    %s43 = sphi 0, %s45
    %s46 = sphi 0, %s43
    %s47 = sphi 0, %s46
    %s63 = sphi 0, %s47
  $region4: #{identical_pool_forward.1} parent=0 // loop_header_branch
    %10 = sbr.rel (%p8) target = $region8
  $region5: #{identical_pool_forward.1} parent=0 // loop_body
    %s12 = ssub.s32 %s7, 1
    %s13 = ssub.s32 %s7, 2
    %s14 = sadd.s32 %s7, 1
    %s15 = ssub.s32 %s7, %s14
    %p16 = scmp.eq.s32.totalorder %s15, 0
    %s18 = sadd.s32 %s17, 1
    %s19 = scalar_select %p16, %s17, %s18
    %p22 = pneg %p16
    %p23 = scmp.eq.s32.totalorder %s7, 3
    %p24 = por %p22, %p23
    %p25 = scmp.ne.s32.totalorder %s17, %s20
    %p26 = scmp.eq.s32.totalorder %s7, 0
    %p27 = por %p25, %p26
    %p28 = scmp.ne.s32.totalorder %s17, %s20
    %p29 = scmp.eq.s32.totalorder %s12, 3
    %p30 = por %p28, %p29
    %p31 = scmp.ne.s32.totalorder %s20, %s21
    %p32 = scmp.eq.s32.totalorder %s12, 0
    %p33 = por %p31, %p32
    %p34 = scmp.ne.s32.totalorder %s20, %s21
    %p35 = scmp.eq.s32.totalorder %s13, 3
    %p36 = por %p34, %p35
    %p38 = scmp.ne.s32.totalorder %s21, %s37
    %p39 = scmp.eq.s32.totalorder %s13, 0
    %p40 = por %p38, %p39
    %s41 = ssub.s32 %s7, %s14
    %p42 = scmp.eq.s32.totalorder %s41, 0
    %s44 = sadd.s32 %s43, 1
    %s45 = scalar_select %p42, %s43, %s44
    %p48 = pneg %p42
    %p49 = scmp.eq.s32.totalorder %s7, 3
    %p50 = por %p48, %p49
    %p51 = scmp.ne.s32.totalorder %s43, %s46
    %p52 = scmp.eq.s32.totalorder %s7, 0
    %p53 = por %p51, %p52
    %p54 = scmp.ne.s32.totalorder %s43, %s46
    %p55 = scmp.eq.s32.totalorder %s12, 3
    %p56 = por %p54, %p55
    %p57 = scmp.ne.s32.totalorder %s46, %s47
    %p58 = scmp.eq.s32.totalorder %s12, 0
    %p59 = por %p57, %p58
    %p60 = scmp.ne.s32.totalorder %s46, %s47
    %p61 = scmp.eq.s32.totalorder %s13, 3
    %p62 = por %p60, %p61
    %p64 = scmp.ne.s32.totalorder %s47, %s63
    %p65 = scmp.eq.s32.totalorder %s13, 0
    %p66 = por %p64, %p65
    %p67 = scmp.le.s32.totalorder 1, %s7
    %p68 = scmp.lt.s32.totalorder %s7, 5
    %p69 = pnand %p67, %p68
    %p70 = pneg %p69
    // Predicated region
    $region9: #{identical_pool_forward.1} parent=5 // pred_check
      _
    $region10: #{identical_pool_forward.1} parent=5 // pred_check_branch
      %72 = sbr.rel (%p69) target = $region12
    $region11: #{identical_pool_forward.1} parent=5 // pred_region
      %s73 = ssub.s32 %s7, 1
    $region12: #{identical_pool_forward.1} parent=5 // pred_fallthru
      _
    %p74 = scmp.lt.s32.totalorder %s7, 4
    // Predicated region
    $region13: #{identical_pool_forward.1} parent=5 // pred_check
      %p75 = pneg %p74
    $region14: #{identical_pool_forward.1} parent=5 // pred_check_branch
      %77 = sbr.rel (%p75) target = $region16
    $region15: #{identical_pool_forward.1} parent=5 // pred_region
      // Predicated region
      $region17: #{identical_pool_forward.1} parent=15 // pred_check
        %p78 = pneg %p27
      $region18: #{identical_pool_forward.1} parent=15 // pred_check_branch
        %80 = sbr.rel (%p78) target = $region20
      $region19: #{identical_pool_forward.1} parent=15 // pred_region
        %s81 = smul.u32 2, %s7
        %p82 = scmp.lt.s32.totalorder %s81, 7
        %s83 = scalar_select %p82, %s81, 7
        %s84 = smul.addr %s83, 8
        %s85 = scalar_lea.vmem %s0, %s84
        %s86 = smul.u32 2, %s7
      $region20: #{identical_pool_forward.1} parent=15 // pred_fallthru
        _
    $region16: #{identical_pool_forward.1} parent=5 // pred_fallthru
      _
    %p87 = scmp.le.s32.totalorder 1, %s7
    %p88 = scmp.lt.s32.totalorder %s7, 5
    %p89 = pnand %p87, %p88
    %p90 = pneg %p89
    // Predicated region
    $region21: #{identical_pool_forward.1} parent=5 // pred_check
      _
    $region22: #{identical_pool_forward.1} parent=5 // pred_check_branch
      %92 = sbr.rel (%p89) target = $region24
    $region23: #{identical_pool_forward.1} parent=5 // pred_region
      %s93 = ssub.s32 %s7, 1
      %s94 = smul.u32 2, %s12
      %p95 = scmp.lt.s32.totalorder %s94, 7
      %s96 = scalar_select %p95, %s94, 7
      %s97 = smul.addr %s96, 8
      %s98 = scalar_lea.vmem %s0, %s97
      %p99 = pneg %p33
      %p100 = pneg %p30
      %p101 = pneg %p59
      %p102 = pneg %p56
      %s103 = smul.u32 2, %s12
      %p104 = scmp.lt.s32.totalorder %s103, 7
      %s105 = scalar_select %p104, %s103, 7
      %s106 = smul.addr %s105, 8
      %s107 = scalar_lea.vmem %s1, %s106
      %s108 = smul.u32 2, %s12
      %p109 = scmp.lt.s32.totalorder %s108, 7
      %s110 = scalar_select %p109, %s108, 7
      %s111 = smul.addr %s110, 8
      %s112 = scalar_lea.vmem %s0, %s111
      %s113 = smul.u32 2, %s12
      %s114 = smul.u32 2, %s12
      %p115 = scmp.lt.s32.totalorder %s114, 7
      %s116 = scalar_select %p115, %s114, 7
      %s117 = smul.addr %s116, 8
      %s118 = scalar_lea.vmem %s1, %s117
      %s119 = smul.u32 2, %s12
      %v120 = vld [vmem:[%s112] sm:$0xff]
      %v121 = vld [vmem:[%s112 + $0x8] sm:$0xff]
      %vm122 = vcmask 261120
      %123 = vst.msk [vmem:[%s118] sm:$0xff] %vm122, %v120
      %124 = vst.msk [vmem:[%s118 + $0x8] sm:$0xff] %vm122, %v121
      %s125 = smul.u32 2, %s12
      %p126 = scmp.lt.s32.totalorder %s125, 7
      %s127 = scalar_select %p126, %s125, 7
      %s128 = smul.addr %s127, 8
      %s129 = scalar_lea.vmem %s1, %s128
      // Predicated region
      $region25: #{identical_pool_forward.1} parent=23 // pred_check
        %p130 = pneg %p56
      $region26: #{identical_pool_forward.1} parent=23 // pred_check_branch
        %132 = sbr.rel (%p130) target = $region28
      $region27: #{identical_pool_forward.1} parent=23 // pred_region
        %s133 = smul.u32 2, %s12
      $region28: #{identical_pool_forward.1} parent=23 // pred_fallthru
        _
    $region24: #{identical_pool_forward.1} parent=5 // pred_fallthru
      _
    %p134 = scmp.le.s32.totalorder 2, %s7
    // Predicated region
    $region29: #{identical_pool_forward.1} parent=5 // pred_check
      %p135 = pneg %p134
    $region30: #{identical_pool_forward.1} parent=5 // pred_check_branch
      %137 = sbr.rel (%p135) target = $region32
    $region31: #{identical_pool_forward.1} parent=5 // pred_region
      %s138 = ssub.s32 %s7, 2
      // Predicated region
      $region33: #{identical_pool_forward.1} parent=31 // pred_check
        %p139 = pneg %p62
      $region34: #{identical_pool_forward.1} parent=31 // pred_check_branch
        %141 = sbr.rel (%p139) target = $region36
      $region35: #{identical_pool_forward.1} parent=31 // pred_region
        %s142 = smul.u32 2, %s13
        %p143 = scmp.lt.s32.totalorder %s142, 7
        %s144 = scalar_select %p143, %s142, 7
        %s145 = smul.addr %s144, 8
        %s146 = scalar_lea.vmem %s1, %s145
      $region36: #{identical_pool_forward.1} parent=31 // pred_fallthru
        _
    $region32: #{identical_pool_forward.1} parent=5 // pred_fallthru
      _
  $region6: #{identical_pool_forward.1} parent=0 // loop_footer
    %s11 = sadd.s32 1, %s7
  $region7: #{identical_pool_forward.1} parent=0 // loop_footer_branch
    %6 = sbr.rel target = $region3
  $region8: #{identical_pool_forward.1} parent=0 // loop_exit
    _

</llo_original>
